<compile_context>
chip_gen: v7x
topology: tpu7x:2x2x1
jax: 0.10.0
libtpu: 0.0.40
codegen_flags: <defaults>
</compile_context>

<pallas_src>
import functools

import jax
import jax.numpy as jnp
from jax.experimental import pallas as pl
from jax.experimental.pallas import tpu as pltpu

LANES = 128


# ----------------------------- kernel body ---------------------------------
def _unary_op_kernel(x_ref, y_ref, *, op):
    # fused: cast to target dtype, apply the unary op, store
    y_ref[...] = op(x_ref[...].astype(y_ref.dtype)).astype(y_ref.dtype)


def _sublane_pack(dt):
    # native sublane packing: f32 -> 8, bf16/f16 -> 16, int8/fp8 -> 32
    return max(8, 32 // jnp.dtype(dt).itemsize)


# ------------------------------ wrapper -------------------------------------
def unary_op_out_net(x, *, op=jax.nn.relu, dtype=jnp.float32, block_rows=2048):
    """Pallas equivalent of unary_op_out_net.forward(x) -> (y1, z).

    y1 and z alias the same tensor (op(x.to(dtype))) in the PyTorch module,
    so we compute it once and return it twice.
    """
    orig_shape = x.shape
    n_elem = x.size
    in_dtype = jnp.dtype(x.dtype)
    out_dtype = jnp.dtype(dtype)

    if n_elem == 0:
        y = jnp.zeros(orig_shape, out_dtype)
        return y, y

    # dtype-aware sublane alignment so loads AND stores stay vreg-dense
    sublanes = max(_sublane_pack(in_dtype), _sublane_pack(out_dtype))
    chunk = sublanes * LANES

    x_flat = jnp.ravel(x)
    bulk_elems = (n_elem // chunk) * chunk
    pieces = []

    if bulk_elems > 0:
        bulk_rows = bulk_elems // LANES
        x_bulk = x_flat if bulk_elems == n_elem else x_flat[:bulk_elems]
        x2d = x_bulk.reshape(bulk_rows, LANES)

        # --- tile sizing ----------------------------------------------------
        tile_rows = min(block_rows, bulk_rows)
        # v7x megacore: aim for >= 8 grid steps on big inputs so both
        # TensorCores get work, but never shrink tiles below ~256 rows for it.
        tile_rows = min(tile_rows, max(pl.cdiv(bulk_rows, 8), 256))
        # keep double-buffered (in + out) blocks within v5e's 16 MiB default
        # scoped VMEM (12 MiB budget leaves headroom)
        bytes_per_row = LANES * (in_dtype.itemsize + out_dtype.itemsize)
        tile_rows = min(tile_rows, (12 << 20) // (2 * bytes_per_row))
        # align to the sublane packing; Pallas masks writes of the
        # (sublane-aligned) partial last block when cdiv is not exact
        tile_rows = max(sublanes, (tile_rows // sublanes) * sublanes)

        grid = (pl.cdiv(bulk_rows, tile_rows),)
        spec = pl.BlockSpec((tile_rows, LANES), lambda i: (i, 0))

        kernel = functools.partial(_unary_op_kernel, op=op)
        cost = pl.CostEstimate(
            flops=bulk_elems,
            transcendentals=0,
            bytes_accessed=bulk_elems * (in_dtype.itemsize + out_dtype.itemsize),
        )

        y2d = pl.pallas_call(
            kernel,
            grid_spec=pltpu.PrefetchScalarGridSpec(
                num_scalar_prefetch=0,
                grid=grid,
                in_specs=[spec],
                out_specs=spec,
            ),
            out_shape=jax.ShapeDtypeStruct((bulk_rows, LANES), out_dtype),
            compiler_params=pltpu.CompilerParams(
                dimension_semantics=("parallel",)
            ),
            cost_estimate=cost,
        )(x2d)
        pieces.append(y2d.reshape(-1))

    if bulk_elems != n_elem:
        # sub-tile remainder (< sublanes*128 elements): cheaper in plain jnp
        # than padding the whole array through HBM and slicing it back.
        tail = x_flat[bulk_elems:]
        pieces.append(op(tail.astype(out_dtype)).astype(out_dtype))

    y_flat = pieces[0] if len(pieces) == 1 else jnp.concatenate(pieces)
    y = y_flat.reshape(orig_shape)
    # y1 and z are the same tensor in the PyTorch module -> return it twice.
    return y, y


# ------------------------------ test main ------------------------------------
if __name__ == "__main__":
    key = jax.random.PRNGKey(0)
    # NCHW input, small shape consistent with the PyTorch test harness
    x = jax.random.normal(key, (2, 4, 16, 16), dtype=jnp.float32)

    op = jax.nn.relu
    dtype = jnp.float32

    y1, z = unary_op_out_net(x, op=op, dtype=dtype)
    y1, z = jax.block_until_ready((y1, z))

    # reference check in plain JAX
    x1_ref = x.astype(dtype)
    y_ref = op(x1_ref)
    assert y1.shape == x.shape and z.shape == x.shape
    assert y1.dtype == jnp.dtype(dtype) and z.dtype == jnp.dtype(dtype)
    assert jnp.allclose(y1, y_ref, atol=1e-6), "y1 mismatch"
    assert jnp.allclose(z, y_ref, atol=1e-6), "z mismatch"

    print("KERNEL_OK")
</pallas_src>

<mosaic_0001>
module attributes {stable_mosaic.version = 11 : i64} {
  func.func @_unary_op_kernel(%arg0: i32, %arg1: memref<16x128xf32, #tpu.memory_space<vmem>>, %arg2: memref<16x128xf32, #tpu.memory_space<vmem>>) attributes {dimension_semantics = [#tpu.dimension_semantics<parallel>], iteration_bounds = array<i64: 1>, scalar_prefetch = 0 : i64, scratch_operands = 0 : i64, tpu.core_type = #tpu.core_type<tc>, window_params = [{transform_indices = @transform_0, window_bounds = array<i64: 16, 128>}, {transform_indices = @transform_1, window_bounds = array<i64: 16, 128>}]} {
    %c0 = arith.constant 0 : index
    %c0_0 = arith.constant 0 : index
    %0 = vector.load %arg1[%c0, %c0_0] : memref<16x128xf32, #tpu.memory_space<vmem>>, vector<16x128xf32>
    %cst = arith.constant 0.000000e+00 : f32
    %1 = vector.broadcast %cst : f32 to vector<16x128xf32>
    %2 = arith.maximumf %0, %1 : vector<16x128xf32>
    %c0_1 = arith.constant 0 : index
    %c0_2 = arith.constant 0 : index
    %3 = vector.load %arg2[%c0_1, %c0_2] : memref<16x128xf32, #tpu.memory_space<vmem>>, vector<16x128xf32>
    tpu.vector_store %arg2[%c0_1, %c0_2], %2 {strides = array<i32>} : memref<16x128xf32, #tpu.memory_space<vmem>>, vector<16x128xf32>,
    return
  }
  func.func @transform_0(%arg0: i32) -> (i32, i32) {
    %c0_i32 = arith.constant 0 : i32
    %c0_i32_0 = arith.constant 0 : i32
    return %arg0, %c0_i32 : i32, i32
  }
  func.func @transform_1(%arg0: i32) -> (i32, i32) {
    %c0_i32 = arith.constant 0 : i32
    %c0_i32_0 = arith.constant 0 : i32
    return %arg0, %c0_i32 : i32, i32
  }
}

</mosaic_0001>

<llo_original>
// kernel: tpu_custom_call.1
$region0: #{tpu_custom_call.1}
  #allocation0 [shape = 'u32[]', space=smem, size = 0x4, offset = 0x4, fixed_abs, tag = 'smem constant byte address 0x4 - core index']
  #allocation1 [shape = 'u32[144,128]{1,0:T(1,128)}', space=vmem, size = 0x12000, scoped, tag = 'internal scratch']
  %s0 = inlined_call_operand.hbm [shape: f32[16,128], index: 0, kind: input, shape index: {}]
  %s1 = inlined_call_operand.hbm [shape: f32[16,128], index: 1, kind: output, shape index: {}]
  %s2 = sld [smem:[#allocation0]]
  $region18: #{tpu_custom_call.1} parent=0
    _
  %s4 = ssub.s32 1, %s2
  %s5 = scalar_select 0, %s4, %s2
  $region1: #{tpu_custom_call.1} parent=0
    #allocation2 [shape = 'u8[8192]{0}', space=vmem, size = 0x2000, scoped, tag = 'input window, operand 0, single buffered']
    #allocation3 [shape = 's32[1]{0}', space=sflag, size = 0x4, scoped, tag = 'scoped memory for tpu_custom_call.1']
    #allocation4 [shape = 's32[1]{0}', space=sflag, size = 0x4, scoped, tag = 'scoped memory for tpu_custom_call.1']
    #allocation5 [shape = 'u8[8192]{0}', space=vmem, size = 0x2000, scoped, tag = 'output window, operand 0, single buffered']
    %6 = vsyncpa [#allocation3], 0
    %7 = vsyncpa [#allocation4], 0
    // Predicated region
    $region2: #{tpu_custom_call.1} parent=1 // pred_check
      _
    $region3: #{tpu_custom_call.1} parent=1 // pred_check_branch
      %9 = sbr.rel (0) target = $region5
    $region4: #{tpu_custom_call.1} parent=1 // pred_region
      %s11 = ssub.s32 256, 256
      %12 = vsyncadd [#allocation3], %s11
      %s13 = sshll.u32 [#allocation2], 4
      %s14 = int_to_ptr.vmem [resolvable:$true] %s13
      %19 = dma.hbm_to_vmem [thread:$0]  %s0, 256, %s14, [#allocation3], 128, 128, 8
    $region5: #{tpu_custom_call.1} parent=1 // pred_fallthru
      _
    // Predicated region
    $region6: #{tpu_custom_call.1} parent=1 // pred_check
      _
    $region7: #{tpu_custom_call.1} parent=1 // pred_check_branch
      %21 = sbr.rel (0) target = $region9
    $region8: #{tpu_custom_call.1} parent=1 // pred_region
      %22 = dma.done [#allocation3], 256
    $region9: #{tpu_custom_call.1} parent=1 // pred_fallthru
      _
    %v23 = vld [vmem:[#allocation2] sm:$0xff]
    %v24 = vld [vmem:[#allocation2 + $0x8] sm:$0xff]
    %v25 = vmax.f32 %v23, 0.0
    %v26 = vmax.f32 %v24, 0.0
    %27 = vst [vmem:[#allocation5] sm:$0xff] %v25
    %28 = vst [vmem:[#allocation5 + $0x8] sm:$0xff] %v26
    // Predicated region
    $region10: #{tpu_custom_call.1} parent=1 // pred_check
      _
    $region11: #{tpu_custom_call.1} parent=1 // pred_check_branch
      %30 = sbr.rel (0) target = $region13
    $region12: #{tpu_custom_call.1} parent=1 // pred_region
      %s32 = ssub.s32 256, 256
      %33 = vsyncadd [#allocation4], %s32
      %s34 = sshll.u32 [#allocation5], 4
      %s35 = int_to_ptr.vmem [resolvable:$true] %s34
      %40 = dma.vmem_to_hbm [thread:$0]  %s35, 256, %s1, [#allocation4], 128, 128, 8
    $region13: #{tpu_custom_call.1} parent=1 // pred_fallthru
      _
    // Predicated region
    $region14: #{tpu_custom_call.1} parent=1 // pred_check
      _
    $region15: #{tpu_custom_call.1} parent=1 // pred_check_branch
      %42 = sbr.rel (0) target = $region17
    $region16: #{tpu_custom_call.1} parent=1 // pred_region
      %43 = dma.done [#allocation4], 256
    $region17: #{tpu_custom_call.1} parent=1 // pred_fallthru
      _
    %44 = vsyncpa [#allocation3], 1
    %45 = vsyncpa [#allocation4], 1

</llo_original>
